<compile_context>
chip_gen: v7x
topology: tpu7x:2x2x1
jax: 0.10.0
libtpu: 0.0.40
codegen_flags: <defaults>
</compile_context>

<pallas_src>
import jax
import jax.numpy as jnp
from jax import lax
from jax.experimental import pallas as pl
from jax.experimental.pallas import tpu as pltpu


_NEG_BIG = -1e30  # padded-logit fill: exp(_NEG_BIG - m) == 0 -> softmax unchanged


def _aux_head_kernel(x_ref, w_ref, b_ref, logits_ref, probs_ref):
    # x_ref:      (TB, in_ch)     VMEM
    # w_ref:      (N_pad, in_ch)  VMEM   (natural nn.Linear layout, lane-dense)
    # b_ref:      (1, N_pad)      VMEM   (padded entries = -1e30)
    # logits_ref: (TB, N_pad)     VMEM   (lane-dense: N_pad % 128 == 0)
    # probs_ref:  (TB, N_pad)     VMEM
    x = x_ref[...]
    w = w_ref[...]
    b = b_ref[...]

    # Linear layer on the MXU: contract in_ch of x with in_ch of w -> (TB, N_pad).
    logits = lax.dot_general(
        x, w,
        dimension_numbers=(((1,), (1,)), ((), ())),
        preferred_element_type=jnp.float32,
    ) + b

    # Numerically stable softmax over the num_aux axis.
    # Padded columns hold -1e30 -> exp == 0 -> denominator is unchanged.
    m = jnp.max(logits, axis=-1, keepdims=True)
    e = jnp.exp(logits - m)
    denom = jnp.sum(e, axis=-1, keepdims=True)
    probs = e / denom  # exact divide: rows sum to 1 within f32 rounding

    logits_ref[...] = logits.astype(logits_ref.dtype)
    probs_ref[...] = probs.astype(probs_ref.dtype)


def _choose_batch_tile(B, max_tile):
    """Pick (TB, n_tiles, B_pad).

    Prefers a TB that divides B (no padded copy of x), is a multiple of 8,
    and gives >= 2 tiles when B >= 16 so the parallel grid axis can shard
    across TensorCores and the input DMA double-buffers.
    """
    if B <= max_tile and (B < 16 or B % 8 != 0):
        return B, 1, B                      # single full-array block
    if B <= max_tile:
        cap = max(8, min(max_tile, (B // 2) // 8 * 8))
    else:
        cap = max(8, (max_tile // 8) * 8)
    for tb in range(cap, 7, -8):
        if B % tb == 0:
            return tb, B // tb, B
    # Ragged B with no 8-aligned divisor: fall back to padding (extra x copy).
    tb = max(8, (min(max_tile, -(-B // 2)) + 7) // 8 * 8)
    n = -(-B // tb)
    return tb, n, n * tb


def auxiliary_head(x, weight, bias, *, max_batch_tile=512):
    """x: (B, in_ch) f32; weight: (num_aux, in_ch); bias: (num_aux,).

    Returns (logits, probs), mirroring the PyTorch forward
    (x_aux, softmax(x_aux, dim=1)).
    """
    B, in_ch = x.shape
    num_aux, in_ch_w = weight.shape
    assert in_ch_w == in_ch

    # Lane-dense outputs: pad num_aux up to a multiple of 128.
    N_pad = max(128, -(-num_aux // 128) * 128)
    if N_pad != num_aux:
        weight = jnp.pad(weight, ((0, N_pad - num_aux), (0, 0)))
        bias = jnp.concatenate(
            [bias, jnp.full((N_pad - num_aux,), _NEG_BIG, bias.dtype)])
    b2 = bias.reshape(1, N_pad)

    # Batch tile, capped by a conservative VMEM budget:
    #   x double-buffered (2x) + two outputs double-buffered (2x each).
    vmem_budget = 12 * 1024 * 1024  # well under v5e's 16 MiB scoped default
    bytes_per_row = 4 * (2 * in_ch + 4 * N_pad)
    tb_vmem_cap = max(8, (vmem_budget // bytes_per_row) // 8 * 8)
    TB, n_tiles, B_pad = _choose_batch_tile(B, min(max_batch_tile, tb_vmem_cap))
    if B_pad != B:
        x = jnp.pad(x, ((0, B_pad - B), (0, 0)))

    out_shapes = (
        jax.ShapeDtypeStruct((B_pad, N_pad), jnp.float32),
        jax.ShapeDtypeStruct((B_pad, N_pad), jnp.float32),
    )

    cost = pl.CostEstimate(
        flops=2 * B_pad * in_ch * N_pad,
        transcendentals=B_pad * N_pad,  # exp
        bytes_accessed=4 * (B_pad * in_ch + N_pad * in_ch + N_pad
                            + 2 * B_pad * N_pad),
    )

    logits, probs = pl.pallas_call(
        _aux_head_kernel,
        out_shape=out_shapes,
        grid_spec=pltpu.PrefetchScalarGridSpec(
            num_scalar_prefetch=0,
            grid=(n_tiles,),
            in_specs=[
                pl.BlockSpec((TB, in_ch), lambda i: (i, 0)),       # x tile
                pl.BlockSpec((N_pad, in_ch), lambda i: (0, 0)),    # weight (resident)
                pl.BlockSpec((1, N_pad), lambda i: (0, 0)),        # bias (resident)
            ],
            out_specs=[
                pl.BlockSpec((TB, N_pad), lambda i: (i, 0)),
                pl.BlockSpec((TB, N_pad), lambda i: (i, 0)),
            ],
        ),
        compiler_params=pltpu.CompilerParams(
            # Batch tiles are independent -> parallel (megacore sharding on v7x).
            dimension_semantics=("parallel",),
        ),
        cost_estimate=cost,
    )(x, weight, b2)

    if B_pad != B:
        logits = logits[:B]
        probs = probs[:B]
    if N_pad != num_aux:
        logits = logits[:, :num_aux]
        probs = probs[:, :num_aux]
    return logits, probs


def _check(B, in_ch, num_aux, key):
    kx, kw, kb = jax.random.split(key, 3)
    x = jax.random.normal(kx, (B, in_ch), dtype=jnp.float32)
    weight = jax.random.normal(kw, (num_aux, in_ch), dtype=jnp.float32) * 0.02
    bias = jax.random.normal(kb, (num_aux,), dtype=jnp.float32) * 0.02

    logits, probs = auxiliary_head(x, weight, bias)
    jax.block_until_ready((logits, probs))

    ref_logits = x @ weight.T + bias
    ref_probs = jax.nn.softmax(ref_logits, axis=1)
    # Tolerances cover MXU-vs-XLA default matmul precision differences.
    assert jnp.allclose(logits, ref_logits, atol=5e-3, rtol=5e-3)
    assert jnp.allclose(probs, ref_probs, atol=5e-3, rtol=5e-3)
    # In-kernel softmax uses an exact divide -> rows sum to 1 tightly.
    assert jnp.allclose(jnp.sum(probs, axis=1), 1.0, atol=1e-4)
    assert logits.shape == (B, num_aux) and probs.shape == (B, num_aux)


if __name__ == "__main__":
    # Small shapes consistent with the module: nn.Linear(in_ch, num_aux).
    key = jax.random.PRNGKey(0)
    k1, k2 = jax.random.split(key)
    _check(B=8, in_ch=128, num_aux=16, key=k1)    # single-tile path
    _check(B=32, in_ch=128, num_aux=16, key=k2)   # multi-tile (grid=2) path
    print("KERNEL_OK")
</pallas_src>

<mosaic_0001>
module attributes {stable_mosaic.version = 11 : i64} {
  func.func @_aux_head_kernel(%arg0: i32, %arg1: memref<8x128xf32, #tpu.memory_space<vmem>>, %arg2: memref<128x128xf32, #tpu.memory_space<vmem>>, %arg3: memref<1x128xf32, #tpu.memory_space<vmem>>, %arg4: memref<8x128xf32, #tpu.memory_space<vmem>>, %arg5: memref<8x128xf32, #tpu.memory_space<vmem>>) attributes {dimension_semantics = [#tpu.dimension_semantics<parallel>], iteration_bounds = array<i64: 1>, scalar_prefetch = 0 : i64, scratch_operands = 0 : i64, tpu.core_type = #tpu.core_type<tc>, window_params = [{transform_indices = @transform_0, window_bounds = array<i64: 8, 128>}, {pipeline_mode = #tpu.pipeline_mode<synchronous>, transform_indices = @transform_1, window_bounds = array<i64: 128, 128>}, {pipeline_mode = #tpu.pipeline_mode<synchronous>, transform_indices = @transform_2, window_bounds = array<i64: 1, 128>}, {transform_indices = @transform_3, window_bounds = array<i64: 8, 128>}, {transform_indices = @transform_4, window_bounds = array<i64: 8, 128>}]} {
    %c0 = arith.constant 0 : index
    %c0_0 = arith.constant 0 : index
    %0 = vector.load %arg1[%c0, %c0_0] : memref<8x128xf32, #tpu.memory_space<vmem>>, vector<8x128xf32>
    %c0_1 = arith.constant 0 : index
    %c0_2 = arith.constant 0 : index
    %1 = vector.load %arg2[%c0_1, %c0_2] : memref<128x128xf32, #tpu.memory_space<vmem>>, vector<128x128xf32>
    %c0_3 = arith.constant 0 : index
    %c0_4 = arith.constant 0 : index
    %2 = vector.load %arg3[%c0_3, %c0_4] : memref<1x128xf32, #tpu.memory_space<vmem>>, vector<1x128xf32>
    %cst = arith.constant dense<0.000000e+00> : vector<8x128xf32>
    %3 = tpu.matmul %0, %1, %cst {dimension_numbers = #tpu.dot_dimension_numbers<[1], [1], [0], [0], [0, 0, 1, 0], [], []>} : vector<8x128xf32>, vector<128x128xf32>, vector<8x128xf32> -> vector<8x128xf32>
    %4 = vector.broadcast %2 : vector<1x128xf32> to vector<8x128xf32>
    %5 = arith.addf %3, %4 : vector<8x128xf32>
    %cst_5 = arith.constant dense<0xFF800000> : vector<8xf32>
    %6 = vector.multi_reduction <maximumf>, %5, %cst_5 [1] : vector<8x128xf32> to vector<8xf32>
    %7 = vector.shape_cast %6 : vector<8xf32> to vector<8x1xf32>
    %8 = vector.broadcast %7 : vector<8x1xf32> to vector<8x128xf32>
    %9 = arith.subf %5, %8 : vector<8x128xf32>
    %10 = math.exp %9 : vector<8x128xf32>
    %cst_6 = arith.constant dense<0.000000e+00> : vector<8xf32>
    %11 = vector.multi_reduction <add>, %10, %cst_6 [1] : vector<8x128xf32> to vector<8xf32>
    %12 = vector.shape_cast %11 : vector<8xf32> to vector<8x1xf32>
    %13 = vector.broadcast %12 : vector<8x1xf32> to vector<8x128xf32>
    %14 = arith.divf %10, %13 : vector<8x128xf32>
    %c0_7 = arith.constant 0 : index
    %c0_8 = arith.constant 0 : index
    %15 = vector.load %arg4[%c0_7, %c0_8] : memref<8x128xf32, #tpu.memory_space<vmem>>, vector<8x128xf32>
    tpu.vector_store %arg4[%c0_7, %c0_8], %5 {strides = array<i32>} : memref<8x128xf32, #tpu.memory_space<vmem>>, vector<8x128xf32>,
    %c0_9 = arith.constant 0 : index
    %c0_10 = arith.constant 0 : index
    %16 = vector.load %arg5[%c0_9, %c0_10] : memref<8x128xf32, #tpu.memory_space<vmem>>, vector<8x128xf32>
    tpu.vector_store %arg5[%c0_9, %c0_10], %14 {strides = array<i32>} : memref<8x128xf32, #tpu.memory_space<vmem>>, vector<8x128xf32>,
    return
  }
  func.func @transform_0(%arg0: i32) -> (i32, i32) {
    %c0_i32 = arith.constant 0 : i32
    %c0_i32_0 = arith.constant 0 : i32
    return %arg0, %c0_i32 : i32, i32
  }
  func.func @transform_1(%arg0: i32) -> (i32, i32) {
    %c0_i32 = arith.constant 0 : i32
    %c0_i32_0 = arith.constant 0 : i32
    %c0_i32_1 = arith.constant 0 : i32
    return %c0_i32, %c0_i32_0 : i32, i32
  }
  func.func @transform_2(%arg0: i32) -> (i32, i32) {
    %c0_i32 = arith.constant 0 : i32
    %c0_i32_0 = arith.constant 0 : i32
    %c0_i32_1 = arith.constant 0 : i32
    return %c0_i32, %c0_i32_0 : i32, i32
  }
  func.func @transform_3(%arg0: i32) -> (i32, i32) {
    %c0_i32 = arith.constant 0 : i32
    %c0_i32_0 = arith.constant 0 : i32
    return %arg0, %c0_i32 : i32, i32
  }
  func.func @transform_4(%arg0: i32) -> (i32, i32) {
    %c0_i32 = arith.constant 0 : i32
    %c0_i32_0 = arith.constant 0 : i32
    return %arg0, %c0_i32 : i32, i32
  }
}

</mosaic_0001>

<llo_original>
// kernel: tpu_custom_call.1
$region0: #{tpu_custom_call.1}
  #allocation0 [shape = 'u32[]', space=smem, size = 0x4, offset = 0x4, fixed_abs, tag = 'smem constant byte address 0x4 - core index']
  #allocation1 [shape = 'u32[144,128]{1,0:T(1,128)}', space=vmem, size = 0x12000, scoped, tag = 'internal scratch']
  %s0 = inlined_call_operand.hbm [shape: f32[8,128], index: 0, kind: input, shape index: {}]
  %s1 = inlined_call_operand.hbm [shape: f32[128,128], index: 1, kind: input, shape index: {}]
  %s2 = inlined_call_operand.vmem [shape: f32[1,128], index: 2, kind: input, shape index: {}]
  %s3 = inlined_call_operand.hbm [shape: f32[8,128], index: 3, kind: output, shape index: {0}]
  %s4 = inlined_call_operand.hbm [shape: f32[8,128], index: 4, kind: output, shape index: {1}]
  %5 = xla_tuple %s3, %s4
  %s6 = sld [smem:[#allocation0]]
  $region38: #{tpu_custom_call.1} parent=0
    _
  %s8 = ssub.s32 1, %s6
  %s9 = scalar_select 0, %s8, %s6
  $region1: #{tpu_custom_call.1} parent=0
    #allocation2 [shape = 'u8[4096]{0}', space=vmem, size = 0x1000, scoped, tag = 'input window, operand 0, single buffered']
    #allocation3 [shape = 's32[1]{0}', space=sflag, size = 0x4, scoped, tag = 'scoped memory for tpu_custom_call.1']
    #allocation4 [shape = 's32[1]{0}', space=sflag, size = 0x4, scoped, tag = 'scoped memory for tpu_custom_call.1']
    #allocation5 [shape = 'u8[65536]{0}', space=vmem, size = 0x10000, scoped, tag = 'input window, operand 1, single buffered']
    #allocation6 [shape = 's32[1]{0}', space=sflag, size = 0x4, scoped, tag = 'scoped memory for tpu_custom_call.1']
    #allocation7 [shape = 'u8[4096]{0}', space=vmem, size = 0x1000, scoped, tag = 'output window, operand 0, single buffered']
    #allocation8 [shape = 'u8[4096]{0}', space=vmem, size = 0x1000, scoped, tag = 'output window, operand 1, single buffered']
    #allocation9 [shape = 's32[1]{0}', space=sflag, size = 0x4, scoped, tag = 'scoped memory for tpu_custom_call.1']
    %10 = vsyncpa [#allocation3], 0
    %11 = vsyncpa [#allocation6], 0
    %12 = vsyncpa [#allocation4], 0
    %13 = vsyncpa [#allocation9], 0
    // Predicated region
    $region2: #{tpu_custom_call.1} parent=1 // pred_check
      _
    $region3: #{tpu_custom_call.1} parent=1 // pred_check_branch
      %15 = sbr.rel (0) target = $region5
    $region4: #{tpu_custom_call.1} parent=1 // pred_region
      %s17 = ssub.s32 128, 128
      %18 = vsyncadd [#allocation3], %s17
      %s20 = sshll.u32 [#allocation2], 4
      %s21 = int_to_ptr.vmem [resolvable:$true] %s20
      %23 = dma.hbm_to_vmem [thread:$0]  %s0, 128, %s21, [#allocation3]
    $region5: #{tpu_custom_call.1} parent=1 // pred_fallthru
      _
    // Predicated region
    $region6: #{tpu_custom_call.1} parent=1 // pred_check
      _
    $region7: #{tpu_custom_call.1} parent=1 // pred_check_branch
      %25 = sbr.rel (0) target = $region9
    $region8: #{tpu_custom_call.1} parent=1 // pred_region
      %s27 = ssub.s32 2048, 2048
      %28 = vsyncadd [#allocation6], %s27
      %s29 = sshll.u32 [#allocation5], 4
      %s30 = int_to_ptr.vmem [resolvable:$true] %s29
      %35 = dma.hbm_to_vmem [thread:$0]  %s1, 2048, %s30, [#allocation6], 128, 128, 8
    $region9: #{tpu_custom_call.1} parent=1 // pred_fallthru
      _
    // Predicated region
    $region10: #{tpu_custom_call.1} parent=1 // pred_check
      _
    $region11: #{tpu_custom_call.1} parent=1 // pred_check_branch
      %37 = sbr.rel (0) target = $region13
    $region12: #{tpu_custom_call.1} parent=1 // pred_region
      _
    $region13: #{tpu_custom_call.1} parent=1 // pred_fallthru
      _
    // Predicated region
    $region14: #{tpu_custom_call.1} parent=1 // pred_check
      _
    $region15: #{tpu_custom_call.1} parent=1 // pred_check_branch
      %39 = sbr.rel (0) target = $region17
    $region16: #{tpu_custom_call.1} parent=1 // pred_region
      %40 = dma.done [#allocation3], 128
    $region17: #{tpu_custom_call.1} parent=1 // pred_fallthru
      _
    // Predicated region
    $region18: #{tpu_custom_call.1} parent=1 // pred_check
      _
    $region19: #{tpu_custom_call.1} parent=1 // pred_check_branch
      %42 = sbr.rel (0) target = $region21
    $region20: #{tpu_custom_call.1} parent=1 // pred_region
      %43 = dma.done [#allocation6], 2048
    $region21: #{tpu_custom_call.1} parent=1 // pred_fallthru
      _
    %v44 = vld [vmem:[#allocation2] sm:$0xff]
    %v45 = vld [vmem:[#allocation5] sm:$0xff]
    %v46 = vld [vmem:[#allocation5 + $0x8] sm:$0xff]
    %v47 = vld [vmem:[#allocation5 + $0x10] sm:$0xff]
    %v48 = vld [vmem:[#allocation5 + $0x18] sm:$0xff]
    %v49 = vld [vmem:[#allocation5 + $0x20] sm:$0xff]
    %v50 = vld [vmem:[#allocation5 + $0x28] sm:$0xff]
    %v51 = vld [vmem:[#allocation5 + $0x30] sm:$0xff]
    %v52 = vld [vmem:[#allocation5 + $0x38] sm:$0xff]
    %v53 = vld [vmem:[#allocation5 + $0x40] sm:$0xff]
    %v54 = vld [vmem:[#allocation5 + $0x48] sm:$0xff]
    %v55 = vld [vmem:[#allocation5 + $0x50] sm:$0xff]
    %v56 = vld [vmem:[#allocation5 + $0x58] sm:$0xff]
    %v57 = vld [vmem:[#allocation5 + $0x60] sm:$0xff]
    %v58 = vld [vmem:[#allocation5 + $0x68] sm:$0xff]
    %v59 = vld [vmem:[#allocation5 + $0x70] sm:$0xff]
    %v60 = vld [vmem:[#allocation5 + $0x78] sm:$0xff]
    %v61 = vld [vmem:[%s2] sm:$0x1]
    %v63 = vlaneseq
    %v64 = vshrl.u32 %v63, 7
    %v65 = vsub.s32 0, %v64
    %v66 = vrot.slane %v61, %v65
    %68 = vmatprep.subr.mxu0 0.0
    %69 = vmatpush1.xpose.msra.mxu0 %v45
    %70 = vmatprep.subr.mxu0 0.0
    %71 = vmatpush1.xpose.msra.mxu0 %v46
    %72 = vmatprep.subr.mxu0 0.0
    %73 = vmatpush1.xpose.msra.mxu0 %v47
    %74 = vmatprep.subr.mxu0 0.0
    %75 = vmatpush1.xpose.msra.mxu0 %v48
    %76 = vmatprep.subr.mxu0 0.0
    %77 = vmatpush1.xpose.msra.mxu0 %v49
    %78 = vmatprep.subr.mxu0 0.0
    %79 = vmatpush1.xpose.msra.mxu0 %v50
    %80 = vmatprep.subr.mxu0 0.0
    %81 = vmatpush1.xpose.msra.mxu0 %v51
    %82 = vmatprep.subr.mxu0 0.0
    %83 = vmatpush1.xpose.msra.mxu0 %v52
    %84 = vmatprep.subr.mxu0 0.0
    %85 = vmatpush1.xpose.msra.mxu0 %v53
    %86 = vmatprep.subr.mxu0 0.0
    %87 = vmatpush1.xpose.msra.mxu0 %v54
    %88 = vmatprep.subr.mxu0 0.0
    %89 = vmatpush1.xpose.msra.mxu0 %v55
    %90 = vmatprep.subr.mxu0 0.0
    %91 = vmatpush1.xpose.msra.mxu0 %v56
    %92 = vmatprep.subr.mxu0 0.0
    %93 = vmatpush1.xpose.msra.mxu0 %v57
    %94 = vmatprep.subr.mxu0 0.0
    %95 = vmatpush1.xpose.msra.mxu0 %v58
    %96 = vmatprep.subr.mxu0 0.0
    %97 = vmatpush1.xpose.msra.mxu0 %v59
    %98 = vmatprep.subr.mxu0 0.0
    %99 = vmatpush1.xpose.msra.mxu0 %v60
    %100 = vmatprep.subr.mxu0 0.0
    %101 = vmatpush1.xpose.msra.mxu0 0.0
    %102 = vmatprep.subr.mxu0 0.0
    %103 = vmatpush1.xpose.msra.mxu0 0.0
    %104 = vmatprep.subr.mxu0 0.0
    %105 = vmatpush1.xpose.msra.mxu0 0.0
    %106 = vmatprep.subr.mxu0 0.0
    %107 = vmatpush1.xpose.msra.mxu0 0.0
    %108 = vmatprep.subr.mxu0 0.0
    %109 = vmatpush1.xpose.msra.mxu0 0.0
    %110 = vmatprep.subr.mxu0 0.0
    %111 = vmatpush1.xpose.msra.mxu0 0.0
    %112 = vmatprep.subr.mxu0 0.0
    %113 = vmatpush1.xpose.msra.mxu0 0.0
    %114 = vmatprep.subr.mxu0 0.0
    %115 = vmatpush1.xpose.msra.mxu0 0.0
    %116 = vmatprep.subr.mxu0 0.0
    %117 = vmatpush1.xpose.msra.mxu0 0.0
    %118 = vmatprep.subr.mxu0 0.0
    %119 = vmatpush1.xpose.msra.mxu0 0.0
    %120 = vmatprep.subr.mxu0 0.0
    %121 = vmatpush1.xpose.msra.mxu0 0.0
    %122 = vmatprep.subr.mxu0 0.0
    %123 = vmatpush1.xpose.msra.mxu0 0.0
    %124 = vmatprep.subr.mxu0 0.0
    %125 = vmatpush1.xpose.msra.mxu0 0.0
    %126 = vmatprep.subr.mxu0 0.0
    %127 = vmatpush1.xpose.msra.mxu0 0.0
    %128 = vmatprep.subr.mxu0 0.0
    %129 = vmatpush1.xpose.msra.mxu0 0.0
    %130 = vmatprep.subr.mxu0 0.0
    %131 = vmatpush1.xpose.msra.mxu0 0.0
    %132 = vmatprep.mubr.f32.mxu0 0.0
    %133 = vmatmul.mubr.f32.gmra.mrb[0].mxu0 %v44
    %v134 = vpop.f32.mrb[0].mxu0
    %v135 = vadd.f32 %v66, %v134
    %v136 = vpop.f32.mrb[0].mxu0
    %137 = vdwg.mxu0
    %138 = vmax.xlane.f32.xlu0 %v135
    %v139 = vpop.xlane.xlu0 %138
    %v140 = vsub.f32 %v135, %v139
    %v141 = vmul.f32 %v140, 1.442695
    %v142 = vpow.pop %v141
    %143 = vadd.xlane.f32.xlu0 %v142
    %v144 = vpop.xlane.xlu0 %143
    %v145 = vrcp.pop %v144
    %v146 = vmul.f32 %v142, %v145
    %147 = vst [vmem:[#allocation7] sm:$0xff] %v135
    %148 = vst [vmem:[#allocation8] sm:$0xff] %v146
    // Predicated region
    $region22: #{tpu_custom_call.1} parent=1 // pred_check
      _
    $region23: #{tpu_custom_call.1} parent=1 // pred_check_branch
      %150 = sbr.rel (0) target = $region25
    $region24: #{tpu_custom_call.1} parent=1 // pred_region
      %s152 = ssub.s32 128, 128
      %153 = vsyncadd [#allocation4], %s152
      %s155 = sshll.u32 [#allocation7], 4
      %s156 = int_to_ptr.vmem [resolvable:$true] %s155
      %158 = dma.vmem_to_hbm [thread:$0]  %s156, 128, %s3, [#allocation4]
    $region25: #{tpu_custom_call.1} parent=1 // pred_fallthru
      _
    // Predicated region
    $region26: #{tpu_custom_call.1} parent=1 // pred_check
      _
    $region27: #{tpu_custom_call.1} parent=1 // pred_check_branch
      %160 = sbr.rel (0) target = $region29
    $region28: #{tpu_custom_call.1} parent=1 // pred_region
      %s162 = ssub.s32 128, 128
      %163 = vsyncadd [#allocation9], %s162
      %s165 = sshll.u32 [#allocation8], 4
      %s166 = int_to_ptr.vmem [resolvable:$true] %s165
      %168 = dma.vmem_to_hbm [thread:$0]  %s166, 128, %s4, [#allocation9]
    $region29: #{tpu_custom_call.1} parent=1 // pred_fallthru
      _
    // Predicated region
    $region30: #{tpu_custom_call.1} parent=1 // pred_check
      _
    $region31: #{tpu_custom_call.1} parent=1 // pred_check_branch
      %170 = sbr.rel (0) target = $region33
    $region32: #{tpu_custom_call.1} parent=1 // pred_region
      %171 = dma.done [#allocation4], 128
    $region33: #{tpu_custom_call.1} parent=1 // pred_fallthru
      _
    // Predicated region
    $region34: #{tpu_custom_call.1} parent=1 // pred_check
      _
    $region35: #{tpu_custom_call.1} parent=1 // pred_check_branch
      %173 = sbr.rel (0) target = $region37
    $region36: #{tpu_custom_call.1} parent=1 // pred_region
      %174 = dma.done [#allocation9], 128
    $region37: #{tpu_custom_call.1} parent=1 // pred_fallthru
      _
    %175 = vsyncpa [#allocation3], 1
    %176 = vsyncpa [#allocation6], 1
    %177 = vsyncpa [#allocation4], 1
    %178 = vsyncpa [#allocation9], 1

</llo_original>
